<compile_context>
chip_gen: v5e
topology: v5e:2x2
jax: 0.10.0
libtpu: 0.0.40
codegen_flags: <defaults>
</compile_context>

<pallas_src>
import jax
import jax.numpy as jnp
from jax.experimental import pallas as pl
from jax.experimental.pallas import tpu as pltpu

# shapes from the reference docstring: x (batch, 39, 256), spembs (batch, 256)
B, T, H = 2, 39, 256


def _speaker_integrator_kernel(x_ref, sp_ref, out_ref):
    # x_ref: (B, T, H); sp_ref: (B, 1, H) — broadcast over the T (sublane) axis.
    out_ref[...] = x_ref[...] + sp_ref[...]


def speaker_integrator(x, spembs):
    """x: (B, T, H) f32, spembs: (B, H) f32 -> (B, T, H) f32."""
    B_, T_, H_ = x.shape
    sp3 = spembs.reshape(B_, 1, H_).astype(x.dtype)

    fn = pl.pallas_call(
        _speaker_integrator_kernel,
        out_shape=jax.ShapeDtypeStruct((B_, T_, H_), x.dtype),
        grid=(1,),  # single step: problem is tiny, avoid per-step overhead
        in_specs=[
            pl.BlockSpec((B_, T_, H_), lambda i: (0, 0, 0)),  # x, whole array
            pl.BlockSpec((B_, 1, H_), lambda i: (0, 0, 0)),   # spembs (B,1,H)
        ],
        out_specs=pl.BlockSpec((B_, T_, H_), lambda i: (0, 0, 0)),
        input_output_aliases={0: 0},  # out = x + emb: reuse x's HBM buffer
        compiler_params=pltpu.CompilerParams(
            dimension_semantics=("arbitrary",)),
    )
    return fn(x, sp3)


if __name__ == "__main__":
    key = jax.random.PRNGKey(0)
    kx, ks = jax.random.split(key)

    x = jax.random.normal(kx, (B, T, H), jnp.float32)
    spembs = jax.random.normal(ks, (B, H), jnp.float32)

    # Pure-JAX reference (computed BEFORE the kernel call because x's buffer is
    # donated into the output via input_output_aliases).
    expected = x + spembs[:, None, :]

    out = speaker_integrator(x, spembs)
    out = jax.block_until_ready(out)

    assert out.shape == (B, T, H)
    assert jnp.allclose(out, expected, atol=1e-6, rtol=1e-6)

    print("KERNEL_OK")
</pallas_src>

<mosaic_0001>
module attributes {stable_mosaic.version = 11 : i64} {
  func.func @_speaker_integrator_kernel(%arg0: i32, %arg1: memref<2x39x256xf32, #tpu.memory_space<vmem>>, %arg2: memref<2x1x256xf32, #tpu.memory_space<vmem>>, %arg3: memref<2x39x256xf32, #tpu.memory_space<vmem>>) attributes {dimension_semantics = [#tpu.dimension_semantics<arbitrary>], iteration_bounds = array<i64: 1>, scalar_prefetch = 0 : i64, scratch_operands = 0 : i64, tpu.core_type = #tpu.core_type<tc>, window_params = [{pipeline_mode = #tpu.pipeline_mode<synchronous>, transform_indices = @transform_0, window_bounds = array<i64: 2, 39, 256>}, {pipeline_mode = #tpu.pipeline_mode<synchronous>, transform_indices = @transform_1, window_bounds = array<i64: 2, 1, 256>}, {pipeline_mode = #tpu.pipeline_mode<synchronous>, transform_indices = @transform_2, window_bounds = array<i64: 2, 39, 256>}]} {
    %c0 = arith.constant 0 : index
    %c0_0 = arith.constant 0 : index
    %c0_1 = arith.constant 0 : index
    %0 = vector.load %arg1[%c0, %c0_0, %c0_1] : memref<2x39x256xf32, #tpu.memory_space<vmem>>, vector<2x39x256xf32>
    %c0_2 = arith.constant 0 : index
    %c0_3 = arith.constant 0 : index
    %c0_4 = arith.constant 0 : index
    %1 = vector.load %arg2[%c0_2, %c0_3, %c0_4] : memref<2x1x256xf32, #tpu.memory_space<vmem>>, vector<2x1x256xf32>
    %2 = vector.broadcast %1 : vector<2x1x256xf32> to vector<2x39x256xf32>
    %3 = arith.addf %0, %2 : vector<2x39x256xf32>
    %c0_5 = arith.constant 0 : index
    %c0_6 = arith.constant 0 : index
    %c0_7 = arith.constant 0 : index
    %4 = vector.load %arg3[%c0_5, %c0_6, %c0_7] : memref<2x39x256xf32, #tpu.memory_space<vmem>>, vector<2x39x256xf32>
    tpu.vector_store %arg3[%c0_5, %c0_6, %c0_7], %3 {strides = array<i32>} : memref<2x39x256xf32, #tpu.memory_space<vmem>>, vector<2x39x256xf32>,
    return
  }
  func.func @transform_0(%arg0: i32) -> (i32, i32, i32) {
    %c0_i32 = arith.constant 0 : i32
    %c0_i32_0 = arith.constant 0 : i32
    %c0_i32_1 = arith.constant 0 : i32
    %c0_i32_2 = arith.constant 0 : i32
    return %c0_i32, %c0_i32_0, %c0_i32_1 : i32, i32, i32
  }
  func.func @transform_1(%arg0: i32) -> (i32, i32, i32) {
    %c0_i32 = arith.constant 0 : i32
    %c0_i32_0 = arith.constant 0 : i32
    %c0_i32_1 = arith.constant 0 : i32
    %c0_i32_2 = arith.constant 0 : i32
    return %c0_i32, %c0_i32_0, %c0_i32_1 : i32, i32, i32
  }
  func.func @transform_2(%arg0: i32) -> (i32, i32, i32) {
    %c0_i32 = arith.constant 0 : i32
    %c0_i32_0 = arith.constant 0 : i32
    %c0_i32_1 = arith.constant 0 : i32
    %c0_i32_2 = arith.constant 0 : i32
    return %c0_i32, %c0_i32_0, %c0_i32_1 : i32, i32, i32
  }
}

</mosaic_0001>

<llo_original>
// kernel: tpu_custom_call.1
$region0: #{tpu_custom_call.1}
  #allocation0 [shape = 'u32[]', space=smem, size = 0x4, offset = 0x4, fixed_abs, tag = 'smem constant byte address 0x4 - core index']
  #allocation1 [shape = 'u32[72,128]{1,0:T(1,128)}', space=vmem, size = 0x9000, scoped, tag = 'internal scratch']
  %s0 = inlined_call_operand.vmem [shape: f32[2,39,256], index: 0, kind: input, shape index: {}, may-alias: {0,2}]
  %s1 = inlined_call_operand.vmem [shape: f32[2,1,256], index: 1, kind: input, shape index: {}]
  %s2 = inlined_call_operand.vmem [shape: f32[2,39,256], index: 2, kind: output, shape index: {}, may-alias: {0,2}]
  %s3 = sld [smem:[#allocation0]]
  $region18: #{tpu_custom_call.1} parent=0
    _
  %s5 = ssub.s32 1, %s3
  %s6 = scalar_select 0, %s5, %s3
  // Predicated region
  $region2: #{tpu_custom_call.1} parent=0 // pred_check
    _
  $region3: #{tpu_custom_call.1} parent=0 // pred_check_branch
    %8 = sbr.rel (0) target = $region5
  $region4: #{tpu_custom_call.1} parent=0 // pred_region
    _
  $region5: #{tpu_custom_call.1} parent=0 // pred_fallthru
    _
  // Predicated region
  $region6: #{tpu_custom_call.1} parent=0 // pred_check
    _
  $region7: #{tpu_custom_call.1} parent=0 // pred_check_branch
    %10 = sbr.rel (0) target = $region9
  $region8: #{tpu_custom_call.1} parent=0 // pred_region
    _
  $region9: #{tpu_custom_call.1} parent=0 // pred_fallthru
    _
  %v11 = vld [vmem:[%s0] sm:$0xff]
  %v12 = vld [vmem:[%s0 + $0x8] sm:$0xff]
  %v13 = vld [vmem:[%s0 + $0x10] sm:$0xff]
  %v14 = vld [vmem:[%s0 + $0x18] sm:$0xff]
  %v15 = vld [vmem:[%s0 + $0x20] sm:$0xff]
  %v16 = vld [vmem:[%s0 + $0x28] sm:$0xff]
  %v17 = vld [vmem:[%s0 + $0x30] sm:$0xff]
  %v18 = vld [vmem:[%s0 + $0x38] sm:$0xff]
  %v19 = vld [vmem:[%s0 + $0x40] sm:$0x7f]
  %v20 = vld [vmem:[%s0 + $0x48] sm:$0x7f]
  %v21 = vld [vmem:[%s0 + $0x50] sm:$0xff]
  %v22 = vld [vmem:[%s0 + $0x58] sm:$0xff]
  %v23 = vld [vmem:[%s0 + $0x60] sm:$0xff]
  %v24 = vld [vmem:[%s0 + $0x68] sm:$0xff]
  %v25 = vld [vmem:[%s0 + $0x70] sm:$0xff]
  %v26 = vld [vmem:[%s0 + $0x78] sm:$0xff]
  %v27 = vld [vmem:[%s0 + $0x80] sm:$0xff]
  %v28 = vld [vmem:[%s0 + $0x88] sm:$0xff]
  %v29 = vld [vmem:[%s0 + $0x90] sm:$0x7f]
  %v30 = vld [vmem:[%s0 + $0x98] sm:$0x7f]
  %v31 = vld [vmem:[%s1] sm:$0x3]
  %v32 = vld [vmem:[%s1 + $0x2] sm:$0x3]
  %v35 = vperm.slane %v31, 0
  %v36 = vperm.slane %v31, 1
  %v37 = vperm.slane %v32, 0
  %v38 = vperm.slane %v32, 1
  %v43 = vadd.f32 %v11, %v35
  %v44 = vadd.f32 %v12, %v36
  %v45 = vadd.f32 %v13, %v35
  %v46 = vadd.f32 %v14, %v36
  %v47 = vadd.f32 %v15, %v35
  %v48 = vadd.f32 %v16, %v36
  %v49 = vadd.f32 %v17, %v35
  %v50 = vadd.f32 %v18, %v36
  %v51 = vadd.f32 %v19, %v35
  %v52 = vadd.f32 %v20, %v36
  %v53 = vadd.f32 %v21, %v37
  %v54 = vadd.f32 %v22, %v38
  %v55 = vadd.f32 %v23, %v37
  %v56 = vadd.f32 %v24, %v38
  %v57 = vadd.f32 %v25, %v37
  %v58 = vadd.f32 %v26, %v38
  %v59 = vadd.f32 %v27, %v37
  %v60 = vadd.f32 %v28, %v38
  %v61 = vadd.f32 %v29, %v37
  %v62 = vadd.f32 %v30, %v38
  %63 = vst [vmem:[%s2] sm:$0xff] %v43
  %64 = vst [vmem:[%s2 + $0x8] sm:$0xff] %v44
  %65 = vst [vmem:[%s2 + $0x10] sm:$0xff] %v45
  %66 = vst [vmem:[%s2 + $0x18] sm:$0xff] %v46
  %67 = vst [vmem:[%s2 + $0x20] sm:$0xff] %v47
  %68 = vst [vmem:[%s2 + $0x28] sm:$0xff] %v48
  %69 = vst [vmem:[%s2 + $0x30] sm:$0xff] %v49
  %70 = vst [vmem:[%s2 + $0x38] sm:$0xff] %v50
  %71 = vst [vmem:[%s2 + $0x40] sm:$0x7f] %v51
  %72 = vst [vmem:[%s2 + $0x48] sm:$0x7f] %v52
  %73 = vst [vmem:[%s2 + $0x50] sm:$0xff] %v53
  %74 = vst [vmem:[%s2 + $0x58] sm:$0xff] %v54
  %75 = vst [vmem:[%s2 + $0x60] sm:$0xff] %v55
  %76 = vst [vmem:[%s2 + $0x68] sm:$0xff] %v56
  %77 = vst [vmem:[%s2 + $0x70] sm:$0xff] %v57
  %78 = vst [vmem:[%s2 + $0x78] sm:$0xff] %v58
  %79 = vst [vmem:[%s2 + $0x80] sm:$0xff] %v59
  %80 = vst [vmem:[%s2 + $0x88] sm:$0xff] %v60
  %81 = vst [vmem:[%s2 + $0x90] sm:$0x7f] %v61
  %82 = vst [vmem:[%s2 + $0x98] sm:$0x7f] %v62
  // Predicated region
  $region10: #{tpu_custom_call.1} parent=0 // pred_check
    _
  $region11: #{tpu_custom_call.1} parent=0 // pred_check_branch
    %84 = sbr.rel (0) target = $region13
  $region12: #{tpu_custom_call.1} parent=0 // pred_region
    _
  $region13: #{tpu_custom_call.1} parent=0 // pred_fallthru
    _
  // Predicated region
  $region14: #{tpu_custom_call.1} parent=0 // pred_check
    _
  $region15: #{tpu_custom_call.1} parent=0 // pred_check_branch
    %86 = sbr.rel (0) target = $region17
  $region16: #{tpu_custom_call.1} parent=0 // pred_region
    _
  $region17: #{tpu_custom_call.1} parent=0 // pred_fallthru
    _

</llo_original>
